<compile_context>
chip_gen: v7x
topology: tpu7x:2x2x1
jax: 0.10.0
libtpu: 0.0.40
codegen_flags: <defaults>
</compile_context>

<pallas_src>
import functools

import jax
import jax.numpy as jnp
from jax.experimental import pallas as pl
from jax.experimental.pallas import tpu as pltpu


def _round_up(x, m):
    return ((x + m - 1) // m) * m


def _conv_relu_gap_kernel(xa_ref, xb_ref, m_ref, w_ref, o_ref,
                          patch_ref, acc_ref, *, nb, cinp, chunk,
                          s_stride, inv_hw):
    # xa_ref   : (NB, CIN_P, chunk)  bf16  flattened padded rows, lanes [j*chunk, (j+1)*chunk)
    # xb_ref   : (NB, CIN_P, halo)   bf16  halo lanes [(j+1)*chunk, (j+1)*chunk + halo)
    # m_ref    : (2, chunk)          bf16  row 0 = valid-output-lane mask, row 1 = 0
    # w_ref    : (Cout, K1)          bf16  conv taps (+ zero channel pad) + bias col + zero col
    # o_ref    : (1, Cout, NB)       f32   pooled features for this batch block
    # patch_ref: (K1, NB*chunk)      bf16  scratch: im2col tile built in VMEM
    # acc_ref  : (Cout, NB)          f32   running spatial sums across the chunk axis
    j = pl.program_id(1)

    @pl.when(j == 0)
    def _init():
        acc_ref[...] = jnp.zeros_like(acc_ref)

    m2 = m_ref[...]              # (2, chunk)   (mask row, zero row)
    m1 = m2[0:1, :]              # (1, chunk)

    # Build the K-major im2col tile for all NB samples directly in VMEM from
    # the raw flattened image: 9 statically shifted lane windows per sample,
    # masked so row-wrap / tail-padding lanes contribute exactly zero.
    for s in range(nb):                              # static unroll, NB is small
        win = jnp.concatenate([xa_ref[s], xb_ref[s]], axis=-1)   # (CIN_P, chunk+halo)
        lo = s * chunk
        for t in range(9):                           # static unroll over 3x3 taps
            off = (t // 3) * s_stride + (t % 3)      # flat tap offset dh*S + dw
            patch_ref[t * cinp:(t + 1) * cinp, lo:lo + chunk] = (
                win[:, off:off + chunk] * m1)
        # (mask, 0) row pair: folds the bias into the contraction, applied only
        # on valid output lanes.
        patch_ref[9 * cinp:9 * cinp + 2, lo:lo + chunk] = m2

    # Single fused MXU contraction for the whole NB*chunk lane slab
    # (all 9 taps, channel padding and bias folded into K1), f32 accumulation.
    conv = jnp.dot(w_ref[...], patch_ref[...],
                   preferred_element_type=jnp.float32)           # (Cout, NB*chunk)
    act = jnp.maximum(conv, 0.0)                                 # ReLU
    cols = [jnp.sum(act[:, s * chunk:(s + 1) * chunk], axis=-1, keepdims=True)
            for s in range(nb)]
    sums = cols[0] if nb == 1 else jnp.concatenate(cols, axis=-1)  # (Cout, NB)
    acc_ref[...] += sums

    @pl.when(j == pl.num_programs(1) - 1)
    def _finalize():
        # AdaptiveAvgPool2d(1) == spatial sum over all H*W positions / (H*W)
        o_ref[0] = (acc_ref[...] * inv_hw).astype(o_ref.dtype)


def extractor_forward(x_nchw, w_hwio, bias, *, nb_max=8, chunk_cap=1024):
    """Forward of Extractor(base='vgg11', dim=64):
    flatten(AdaptiveAvgPool2d(1)(ReLU(Conv2d(3->64, 3x3, pad=1)(x)))).

    x_nchw: (N, Cin, H, W) f32 (PyTorch layout); w_hwio: (3, 3, Cin, Cout);
    bias: (Cout,).  Returns (N, Cout) f32.
    On v6e/v5e chunk_cap (and nb_max) can be raised to use the larger VMEM.
    """
    N, Cin, H, W = x_nchw.shape
    KH, KW, _, Cout = w_hwio.shape
    assert (KH, KW) == (3, 3)

    S = W + 2                      # row stride of the zero-padded image
    HW = H * W
    L_base = H * S                 # conv "base" lanes (W valid + 2 junk per row)

    # v7x has two TensorCores: keep >= 2 blocks on the parallel batch axis.
    NB = max(1, min(nb_max, -(-N // 2)))
    N_pad = _round_up(N, NB)

    CIN_P = _round_up(Cin, 2)      # even #rows per tap -> aligned bf16 stores
    K1 = 9 * CIN_P + 2             # 9 taps * CIN_P channels + (bias, zero) rows

    halo = _round_up(2 * S + 2, 128)                          # lookahead lanes
    chunk = _round_up(max(128, min(chunk_cap, L_base)), halo)  # multiple of halo & 128
    n_chunks = -(-L_base // chunk)
    L_span = n_chunks * chunk
    L_total = L_span + halo

    # ---- XLA glue (the only HBM staging copy, ~input-sized, vs the 9x im2col
    # tensor of the previous version): zero-pad NCHW (conv padding=1 + batch +
    # channel pad), flatten each padded image to one lane axis, cast to bf16.
    xp = jnp.pad(x_nchw, ((0, N_pad - N), (0, CIN_P - Cin), (1, 1), (1, 1)))
    xf = xp.reshape(N_pad, CIN_P, (H + 2) * S)
    xf = jnp.pad(xf, ((0, 0), (0, 0), (0, L_total - (H + 2) * S)))
    xf = xf.astype(jnp.bfloat16)

    # Valid-output-lane mask: lane q is a real output pixel iff q % S < W and
    # q < H*S.  The second (zero) row lets the kernel store the (mask, 0) pair
    # as one aligned 2-row bf16 block; the mask row doubles as the "ones" row
    # that folds the bias into the contraction.
    q = jnp.arange(L_span, dtype=jnp.int32)
    valid = ((q % S) < W) & (q < L_base)
    mask = jnp.stack(
        [valid.astype(jnp.bfloat16), jnp.zeros((L_span,), jnp.bfloat16)], 0)

    # Weight matrix (Cout, K1): col 4t+c = W[dh, dw, c, :] with t = 3*dh + dw,
    # padded-channel cols are zero, col K1-2 = bias, col K1-1 = 0.
    w_k = jnp.transpose(w_hwio, (3, 0, 1, 2)).reshape(Cout, 9, Cin)
    w_k = jnp.pad(w_k, ((0, 0), (0, 0), (0, CIN_P - Cin))).reshape(Cout, 9 * CIN_P)
    w_full = jnp.concatenate(
        [w_k, bias.reshape(Cout, 1), jnp.zeros((Cout, 1), w_k.dtype)],
        axis=1).astype(jnp.bfloat16)                          # (Cout, K1)

    mult = chunk // halo
    grid = (N_pad // NB, n_chunks)     # (batch blocks [parallel], chunks [arbitrary])
    out3 = pl.pallas_call(
        functools.partial(_conv_relu_gap_kernel, nb=NB, cinp=CIN_P,
                          chunk=chunk, s_stride=S, inv_hw=1.0 / float(HW)),
        grid=grid,
        in_specs=[
            pl.BlockSpec((NB, CIN_P, chunk), lambda n, j: (n, 0, j)),
            pl.BlockSpec((NB, CIN_P, halo), lambda n, j: (n, 0, (j + 1) * mult)),
            pl.BlockSpec((2, chunk), lambda n, j: (0, j)),
            pl.BlockSpec((Cout, K1), lambda n, j: (0, 0)),
        ],
        out_specs=pl.BlockSpec((1, Cout, NB), lambda n, j: (n, 0, 0)),
        out_shape=jax.ShapeDtypeStruct((N_pad // NB, Cout, NB), jnp.float32),
        scratch_shapes=[
            pltpu.VMEM((K1, NB * chunk), jnp.bfloat16),
            pltpu.VMEM((Cout, NB), jnp.float32),
        ],
        compiler_params=pltpu.CompilerParams(
            dimension_semantics=("parallel", "arbitrary"),
            vmem_limit_bytes=32 * 1024 * 1024),
    )(xf, xf, mask, w_full)

    # (blocks, Cout, NB) -> (N, Cout).  The per-block output is only Cout*NB
    # floats, so the layout fix-up is left to XLA.
    out = jnp.transpose(out3, (0, 2, 1)).reshape(N_pad, Cout)[:N]
    return out


if __name__ == "__main__":
    key = jax.random.PRNGKey(0)
    kx, kw, kb = jax.random.split(key, 3)

    # Shapes consistent with Extractor(base='vgg11', dim=64): RGB input,
    # 64 output channels, small spatial size for the test.
    N, Cin, H, W, Cout = 2, 3, 16, 16, 64
    x = jax.random.normal(kx, (N, Cin, H, W), dtype=jnp.float32)
    w = 0.1 * jax.random.normal(kw, (3, 3, Cin, Cout), dtype=jnp.float32)
    b = 0.1 * jax.random.normal(kb, (Cout,), dtype=jnp.float32)

    out = jax.block_until_ready(extractor_forward(x, w, b))

    # Pure-JAX f32 reference (same semantics as the PyTorch forward).
    x_nhwc = jnp.transpose(x, (0, 2, 3, 1))
    conv = jax.lax.conv_general_dilated(
        x_nhwc, w, window_strides=(1, 1), padding="SAME",
        dimension_numbers=("NHWC", "HWIO", "NHWC"))
    ref = jnp.mean(jnp.maximum(conv + b, 0.0), axis=(1, 2))      # (N, Cout)

    assert out.shape == (N, Cout), out.shape
    max_err = float(jnp.max(jnp.abs(out - ref)))
    # bf16 matmul operands (incl. folded bias) with f32 accumulation.
    assert jnp.allclose(out, ref, atol=1e-2, rtol=1e-2), (
        "mismatch vs reference, max abs err = %g" % max_err)
    print("KERNEL_OK")
</pallas_src>

<mosaic_0001>
module attributes {stable_mosaic.version = 11 : i64} {
  func.func @_conv_relu_gap_kernel(%arg0: i32, %arg1: i32, %arg2: memref<1x4x384xbf16, #tpu.memory_space<vmem>>, %arg3: memref<1x4x128xbf16, #tpu.memory_space<vmem>>, %arg4: memref<2x384xbf16, #tpu.memory_space<vmem>>, %arg5: memref<64x38xbf16, #tpu.memory_space<vmem>>, %arg6: memref<1x64x1xf32, #tpu.memory_space<vmem>>, %arg7: memref<38x384xbf16, #tpu.memory_space<vmem>>, %arg8: memref<64x1xf32, #tpu.memory_space<vmem>>) attributes {dimension_semantics = [#tpu.dimension_semantics<parallel>, #tpu.dimension_semantics<arbitrary>], iteration_bounds = array<i64: 2, 1>, scalar_prefetch = 0 : i64, scratch_operands = 2 : i64, tpu.core_type = #tpu.core_type<tc>, window_params = [{transform_indices = @transform_0, window_bounds = array<i64: 1, 4, 384>}, {transform_indices = @transform_1, window_bounds = array<i64: 1, 4, 128>}, {transform_indices = @transform_2, window_bounds = array<i64: 2, 384>}, {pipeline_mode = #tpu.pipeline_mode<synchronous>, transform_indices = @transform_3, window_bounds = array<i64: 64, 38>}, {transform_indices = @transform_4, window_bounds = array<i64: 1, 64, 1>}]} {
    %c0_i32 = arith.constant 0 : i32
    %0 = arith.cmpi eq, %arg1, %c0_i32 : i32
    %1 = arith.extui %0 : i1 to i32
    %c0_i32_0 = arith.constant 0 : i32
    %2 = arith.cmpi ne, %1, %c0_i32_0 : i32
    scf.if %2 {
      %cst_31 = arith.constant 0.000000e+00 : f32
      %60 = vector.broadcast %cst_31 : f32 to vector<64x1xf32>
      %c0_32 = arith.constant 0 : index
      %c0_33 = arith.constant 0 : index
      %61 = vector.load %arg8[%c0_32, %c0_33] : memref<64x1xf32, #tpu.memory_space<vmem>>, vector<64x1xf32>
      tpu.vector_store %arg8[%c0_32, %c0_33], %60 {strides = array<i32>} : memref<64x1xf32, #tpu.memory_space<vmem>>, vector<64x1xf32>,
    } else {
    }
    %c0 = arith.constant 0 : index
    %c0_1 = arith.constant 0 : index
    %3 = vector.load %arg4[%c0, %c0_1] : memref<2x384xbf16, #tpu.memory_space<vmem>>, vector<2x384xbf16>
    %4 = vector.extract_strided_slice %3 {offsets = [0, 0], sizes = [1, 384], strides = [1, 1]} : vector<2x384xbf16> to vector<1x384xbf16>
    %c0_2 = arith.constant 0 : index
    %c0_3 = arith.constant 0 : index
    %c0_4 = arith.constant 0 : index
    %5 = vector.load %arg2[%c0_2, %c0_3, %c0_4] : memref<1x4x384xbf16, #tpu.memory_space<vmem>>, vector<1x4x384xbf16>
    %6 = vector.shape_cast %5 : vector<1x4x384xbf16> to vector<4x384xbf16>
    %c0_5 = arith.constant 0 : index
    %c0_6 = arith.constant 0 : index
    %c0_7 = arith.constant 0 : index
    %7 = vector.load %arg3[%c0_5, %c0_6, %c0_7] : memref<1x4x128xbf16, #tpu.memory_space<vmem>>, vector<1x4x128xbf16>
    %8 = vector.shape_cast %7 : vector<1x4x128xbf16> to vector<4x128xbf16>
    %9 = tpu.concatenate %6, %8 in 1 : vector<4x384xbf16>, vector<4x128xbf16> -> vector<4x512xbf16>
    %10 = vector.extract_strided_slice %9 {offsets = [0, 0], sizes = [4, 384], strides = [1, 1]} : vector<4x512xbf16> to vector<4x384xbf16>
    %11 = vector.broadcast %4 : vector<1x384xbf16> to vector<4x384xbf16>
    %12 = arith.mulf %10, %11 : vector<4x384xbf16>
    %c0_8 = arith.constant 0 : index
    %c0_9 = arith.constant 0 : index
    %13 = vector.load %arg7[%c0_8, %c0_9] : memref<38x384xbf16, #tpu.memory_space<vmem>>, vector<4x384xbf16>
    tpu.vector_store %arg7[%c0_8, %c0_9], %12 {strides = array<i32>} : memref<38x384xbf16, #tpu.memory_space<vmem>>, vector<4x384xbf16>,
    %14 = vector.extract_strided_slice %9 {offsets = [0, 1], sizes = [4, 384], strides = [1, 1]} : vector<4x512xbf16> to vector<4x384xbf16>
    %15 = vector.broadcast %4 : vector<1x384xbf16> to vector<4x384xbf16>
    %16 = arith.mulf %14, %15 : vector<4x384xbf16>
    %c4 = arith.constant 4 : index
    %c0_10 = arith.constant 0 : index
    %17 = vector.load %arg7[%c4, %c0_10] : memref<38x384xbf16, #tpu.memory_space<vmem>>, vector<4x384xbf16>
    tpu.vector_store %arg7[%c4, %c0_10], %16 {strides = array<i32>} : memref<38x384xbf16, #tpu.memory_space<vmem>>, vector<4x384xbf16>,
    %18 = vector.extract_strided_slice %9 {offsets = [0, 2], sizes = [4, 384], strides = [1, 1]} : vector<4x512xbf16> to vector<4x384xbf16>
    %19 = vector.broadcast %4 : vector<1x384xbf16> to vector<4x384xbf16>
    %20 = arith.mulf %18, %19 : vector<4x384xbf16>
    %c8 = arith.constant 8 : index
    %c0_11 = arith.constant 0 : index
    %21 = vector.load %arg7[%c8, %c0_11] : memref<38x384xbf16, #tpu.memory_space<vmem>>, vector<4x384xbf16>
    tpu.vector_store %arg7[%c8, %c0_11], %20 {strides = array<i32>} : memref<38x384xbf16, #tpu.memory_space<vmem>>, vector<4x384xbf16>,
    %22 = vector.extract_strided_slice %9 {offsets = [0, 18], sizes = [4, 384], strides = [1, 1]} : vector<4x512xbf16> to vector<4x384xbf16>
    %23 = vector.broadcast %4 : vector<1x384xbf16> to vector<4x384xbf16>
    %24 = arith.mulf %22, %23 : vector<4x384xbf16>
    %c12 = arith.constant 12 : index
    %c0_12 = arith.constant 0 : index
    %25 = vector.load %arg7[%c12, %c0_12] : memref<38x384xbf16, #tpu.memory_space<vmem>>, vector<4x384xbf16>
    tpu.vector_store %arg7[%c12, %c0_12], %24 {strides = array<i32>} : memref<38x384xbf16, #tpu.memory_space<vmem>>, vector<4x384xbf16>,
    %26 = vector.extract_strided_slice %9 {offsets = [0, 19], sizes = [4, 384], strides = [1, 1]} : vector<4x512xbf16> to vector<4x384xbf16>
    %27 = vector.broadcast %4 : vector<1x384xbf16> to vector<4x384xbf16>
    %28 = arith.mulf %26, %27 : vector<4x384xbf16>
    %c16 = arith.constant 16 : index
    %c0_13 = arith.constant 0 : index
    %29 = vector.load %arg7[%c16, %c0_13] : memref<38x384xbf16, #tpu.memory_space<vmem>>, vector<4x384xbf16>
    tpu.vector_store %arg7[%c16, %c0_13], %28 {strides = array<i32>} : memref<38x384xbf16, #tpu.memory_space<vmem>>, vector<4x384xbf16>,
    %30 = vector.extract_strided_slice %9 {offsets = [0, 20], sizes = [4, 384], strides = [1, 1]} : vector<4x512xbf16> to vector<4x384xbf16>
    %31 = vector.broadcast %4 : vector<1x384xbf16> to vector<4x384xbf16>
    %32 = arith.mulf %30, %31 : vector<4x384xbf16>
    %c20 = arith.constant 20 : index
    %c0_14 = arith.constant 0 : index
    %33 = vector.load %arg7[%c20, %c0_14] : memref<38x384xbf16, #tpu.memory_space<vmem>>, vector<4x384xbf16>
    tpu.vector_store %arg7[%c20, %c0_14], %32 {strides = array<i32>} : memref<38x384xbf16, #tpu.memory_space<vmem>>, vector<4x384xbf16>,
    %34 = vector.extract_strided_slice %9 {offsets = [0, 36], sizes = [4, 384], strides = [1, 1]} : vector<4x512xbf16> to vector<4x384xbf16>
    %35 = vector.broadcast %4 : vector<1x384xbf16> to vector<4x384xbf16>
    %36 = arith.mulf %34, %35 : vector<4x384xbf16>
    %c24 = arith.constant 24 : index
    %c0_15 = arith.constant 0 : index
    %37 = vector.load %arg7[%c24, %c0_15] : memref<38x384xbf16, #tpu.memory_space<vmem>>, vector<4x384xbf16>
    tpu.vector_store %arg7[%c24, %c0_15], %36 {strides = array<i32>} : memref<38x384xbf16, #tpu.memory_space<vmem>>, vector<4x384xbf16>,
    %38 = vector.extract_strided_slice %9 {offsets = [0, 37], sizes = [4, 384], strides = [1, 1]} : vector<4x512xbf16> to vector<4x384xbf16>
    %39 = vector.broadcast %4 : vector<1x384xbf16> to vector<4x384xbf16>
    %40 = arith.mulf %38, %39 : vector<4x384xbf16>
    %c28 = arith.constant 28 : index
    %c0_16 = arith.constant 0 : index
    %41 = vector.load %arg7[%c28, %c0_16] : memref<38x384xbf16, #tpu.memory_space<vmem>>, vector<4x384xbf16>
    tpu.vector_store %arg7[%c28, %c0_16], %40 {strides = array<i32>} : memref<38x384xbf16, #tpu.memory_space<vmem>>, vector<4x384xbf16>,
    %42 = vector.extract_strided_slice %9 {offsets = [0, 38], sizes = [4, 384], strides = [1, 1]} : vector<4x512xbf16> to vector<4x384xbf16>
    %43 = vector.broadcast %4 : vector<1x384xbf16> to vector<4x384xbf16>
    %44 = arith.mulf %42, %43 : vector<4x384xbf16>
    %c32 = arith.constant 32 : index
    %c0_17 = arith.constant 0 : index
    %45 = vector.load %arg7[%c32, %c0_17] : memref<38x384xbf16, #tpu.memory_space<vmem>>, vector<4x384xbf16>
    tpu.vector_store %arg7[%c32, %c0_17], %44 {strides = array<i32>} : memref<38x384xbf16, #tpu.memory_space<vmem>>, vector<4x384xbf16>,
    %c36 = arith.constant 36 : index
    %c0_18 = arith.constant 0 : index
    %46 = vector.load %arg7[%c36, %c0_18] : memref<38x384xbf16, #tpu.memory_space<vmem>>, vector<2x384xbf16>
    tpu.vector_store %arg7[%c36, %c0_18], %3 {strides = array<i32>} : memref<38x384xbf16, #tpu.memory_space<vmem>>, vector<2x384xbf16>,
    %c0_19 = arith.constant 0 : index
    %c0_20 = arith.constant 0 : index
    %47 = vector.load %arg5[%c0_19, %c0_20] : memref<64x38xbf16, #tpu.memory_space<vmem>>, vector<64x38xbf16>
    %c0_21 = arith.constant 0 : index
    %c0_22 = arith.constant 0 : index
    %48 = vector.load %arg7[%c0_21, %c0_22] : memref<38x384xbf16, #tpu.memory_space<vmem>>, vector<38x384xbf16>
    %cst = arith.constant dense<0.000000e+00> : vector<64x384xf32>
    %49 = tpu.matmul %47, %48, %cst {dimension_numbers = #tpu.dot_dimension_numbers<[1], [0], [0], [1], [0, 0, 1, 1], [], []>} : vector<64x38xbf16>, vector<38x384xbf16>, vector<64x384xf32> -> vector<64x384xf32>
    %cst_23 = arith.constant 0.000000e+00 : f32
    %50 = vector.broadcast %cst_23 : f32 to vector<64x384xf32>
    %51 = arith.maximumf %49, %50 : vector<64x384xf32>
    %cst_24 = arith.constant dense<0.000000e+00> : vector<64xf32>
    %52 = vector.multi_reduction <add>, %51, %cst_24 [1] : vector<64x384xf32> to vector<64xf32>
    %53 = vector.shape_cast %52 : vector<64xf32> to vector<64x1xf32>
    %c0_25 = arith.constant 0 : index
    %c0_26 = arith.constant 0 : index
    %54 = vector.load %arg8[%c0_25, %c0_26] : memref<64x1xf32, #tpu.memory_space<vmem>>, vector<64x1xf32>
    %55 = arith.addf %54, %53 : vector<64x1xf32>
    %c0_27 = arith.constant 0 : index
    %c0_28 = arith.constant 0 : index
    %56 = vector.load %arg8[%c0_27, %c0_28] : memref<64x1xf32, #tpu.memory_space<vmem>>, vector<64x1xf32>
    tpu.vector_store %arg8[%c0_27, %c0_28], %55 {strides = array<i32>} : memref<64x1xf32, #tpu.memory_space<vmem>>, vector<64x1xf32>,
    %c0_i32_29 = arith.constant 0 : i32
    %57 = arith.cmpi eq, %arg1, %c0_i32_29 : i32
    %58 = arith.extui %57 : i1 to i32
    %c0_i32_30 = arith.constant 0 : i32
    %59 = arith.cmpi ne, %58, %c0_i32_30 : i32
    scf.if %59 {
      %c0_31 = arith.constant 0 : index
      %c0_32 = arith.constant 0 : index
      %60 = vector.load %arg8[%c0_31, %c0_32] : memref<64x1xf32, #tpu.memory_space<vmem>>, vector<64x1xf32>
      %cst_33 = arith.constant 3.906250e-03 : f32
      %61 = vector.broadcast %cst_33 : f32 to vector<64x1xf32>
      %62 = arith.mulf %60, %61 : vector<64x1xf32>
      %c0_34 = arith.constant 0 : index
      %c0_35 = arith.constant 0 : index
      %c0_36 = arith.constant 0 : index
      %63 = vector.load %arg6[%c0_34, %c0_35, %c0_36] : memref<1x64x1xf32, #tpu.memory_space<vmem>>, vector<1x64x1xf32>
      %64 = vector.shape_cast %63 : vector<1x64x1xf32> to vector<64x1xf32>
      %65 = vector.shape_cast %62 : vector<64x1xf32> to vector<1x64x1xf32>
      tpu.vector_store %arg6[%c0_34, %c0_35, %c0_36], %65 {strides = array<i32>} : memref<1x64x1xf32, #tpu.memory_space<vmem>>, vector<1x64x1xf32>,
    } else {
    }
    return
  }
  func.func @transform_0(%arg0: i32, %arg1: i32) -> (i32, i32, i32) {
    %c0_i32 = arith.constant 0 : i32
    %c0_i32_0 = arith.constant 0 : i32
    return %arg0, %c0_i32, %arg1 : i32, i32, i32
  }
  func.func @transform_1(%arg0: i32, %arg1: i32) -> (i32, i32, i32) {
    %c1_i32 = arith.constant 1 : i32
    %0 = arith.addi %arg1, %c1_i32 : i32
    %c3_i32 = arith.constant 3 : i32
    %1 = arith.muli %0, %c3_i32 : i32
    %c0_i32 = arith.constant 0 : i32
    %c0_i32_0 = arith.constant 0 : i32
    return %arg0, %c0_i32, %1 : i32, i32, i32
  }
  func.func @transform_2(%arg0: i32, %arg1: i32) -> (i32, i32) {
    %c0_i32 = arith.constant 0 : i32
    %c0_i32_0 = arith.constant 0 : i32
    return %c0_i32, %arg1 : i32, i32
  }
  func.func @transform_3(%arg0: i32, %arg1: i32) -> (i32, i32) {
    %c0_i32 = arith.constant 0 : i32
    %c0_i32_0 = arith.constant 0 : i32
    %c0_i32_1 = arith.constant 0 : i32
    return %c0_i32, %c0_i32_0 : i32, i32
  }
  func.func @transform_4(%arg0: i32, %arg1: i32) -> (i32, i32, i32) {
    %c0_i32 = arith.constant 0 : i32
    %c0_i32_0 = arith.constant 0 : i32
    %c0_i32_1 = arith.constant 0 : i32
    return %arg0, %c0_i32, %c0_i32_0 : i32, i32, i32
  }
}

</mosaic_0001>

<llo_original>
// kernel: tpu_custom_call.1
$region0: #{tpu_custom_call.1}
  #allocation0 [shape = 'u32[]', space=smem, size = 0x4, offset = 0x4, fixed_abs, tag = 'smem constant byte address 0x4 - core index']
  #allocation1 [shape = 'u32[144,128]{1,0:T(1,128)}', space=vmem, size = 0x12000, scoped, tag = 'internal scratch']
  #allocation2 [shape = 'bf16[38,384]{1,0:T(8,128)(2,1)}', space=vmem, size = 0x7800, scoped, tag = 'scratch operand']
  #allocation3 [shape = 'f32[64,1]{1,0:T(8,128)}', space=vmem, size = 0x8000, scoped, tag = 'scratch operand']
  %s0 = inlined_call_operand.vmem [shape: bf16[2,4,512], index: 0, kind: input, shape index: {}]
  %s1 = inlined_call_operand.vmem [shape: bf16[2,4,512], index: 1, kind: input, shape index: {}]
  %s2 = inlined_call_operand.vmem [shape: bf16[2,384], index: 2, kind: input, shape index: {}]
  %s3 = inlined_call_operand.vmem [shape: bf16[64,38], index: 3, kind: input, shape index: {}]
  %s4 = inlined_call_operand.vmem [shape: f32[2,64,1], index: 4, kind: output, shape index: {}]
  %s5 = sld [smem:[#allocation0]]
  $region57: #{tpu_custom_call.1} parent=0
    _
  %s7 = ssub.s32 1, %s5
  %s8 = scalar_select 0, %s7, %s5
  loop: start=0, step=1, limit=4
  $region2: #{tpu_custom_call.1} parent=0 // loop_pre_header
    _
  $region3: #{tpu_custom_call.1} parent=0 // loop_header
    %s10 = sphi 0, %s14
    %p11 = scmp.ge.s32.totalorder %s10, 4
    %s17 = sphi 0, %s29
    %s18 = sphi 0, %s25
    %s19 = sphi 0, %s17
    %s20 = sphi 0, %s18
    %s21 = sphi 0, %s19
    %s22 = sphi 0, %s20
    %s34 = sphi 0, %s36
    %s37 = sphi 0, %s34
    %s38 = sphi 0, %s37
    %s54 = sphi 0, %s38
    %s66 = sphi 0, %s68
    %s69 = sphi 0, %s66
    %s70 = sphi 0, %s69
    %s86 = sphi 0, %s70
    %s92 = sphi 0, %s94
    %s95 = sphi 0, %s92
    %s96 = sphi 0, %s95
    %s112 = sphi 0, %s96
    %s116 = sphi 0, %s116
    %s118 = sphi 0, %s116
    %s119 = sphi 0, %s118
    %s133 = sphi 0, %s119
    %s139 = sphi 0, %s141
    %s142 = sphi 0, %s139
    %s143 = sphi 0, %s142
    %s159 = sphi 0, %s143
  $region4: #{tpu_custom_call.1} parent=0 // loop_header_branch
    %13 = sbr.rel (%p11) target = $region8
  $region5: #{tpu_custom_call.1} parent=0 // loop_body
    %s15 = ssub.s32 %s10, 1
    %s16 = ssub.s32 %s10, 2
    %s23 = sadd.s32 1, %s18
    %p24 = scmp.ge.s32.totalorder %s23, 1
    %s25 = scalar_select %p24, 0, %s23
    %s26 = sadd.s32 1, %s17
    %s27 = scalar_select %p24, %s26, %s17
    %p28 = scmp.ge.s32.totalorder %s27, 2
    %s29 = scalar_select %p28, 0, %s27
    %s30 = ssub.s32 %s17, %s29
    %s31 = ssub.s32 %s18, %s25
    %s32 = sor.u32 %s30, %s31
    %p33 = scmp.eq.s32.totalorder %s32, 0
    %s35 = sadd.s32 %s34, 1
    %s36 = scalar_select %p33, %s34, %s35
    %p39 = pneg %p33
    %p40 = scmp.eq.s32.totalorder %s10, 1
    %p41 = por %p39, %p40
    %p42 = scmp.ne.s32.totalorder %s34, %s37
    %p43 = scmp.eq.s32.totalorder %s10, 0
    %p44 = por %p42, %p43
    %p45 = scmp.ne.s32.totalorder %s34, %s37
    %p46 = scmp.eq.s32.totalorder %s15, 1
    %p47 = por %p45, %p46
    %p48 = scmp.ne.s32.totalorder %s37, %s38
    %p49 = scmp.eq.s32.totalorder %s15, 0
    %p50 = por %p48, %p49
    %p51 = scmp.ne.s32.totalorder %s37, %s38
    %p52 = scmp.eq.s32.totalorder %s16, 1
    %p53 = por %p51, %p52
    %p55 = scmp.ne.s32.totalorder %s38, %s54
    %p56 = scmp.eq.s32.totalorder %s16, 0
    %p57 = por %p55, %p56
    %s58 = sadd.s32 %s18, 1
    %s59 = smul.u32 %s58, 3
    %s60 = sadd.s32 %s25, 1
    %s61 = smul.u32 %s60, 3
    %s62 = ssub.s32 %s17, %s29
    %s63 = ssub.s32 %s59, %s61
    %s64 = sor.u32 %s62, %s63
    %p65 = scmp.eq.s32.totalorder %s64, 0
    %s67 = sadd.s32 %s66, 1
    %s68 = scalar_select %p65, %s66, %s67
    %p71 = pneg %p65
    %p72 = scmp.eq.s32.totalorder %s10, 1
    %p73 = por %p71, %p72
    %p74 = scmp.ne.s32.totalorder %s66, %s69
    %p75 = scmp.eq.s32.totalorder %s10, 0
    %p76 = por %p74, %p75
    %p77 = scmp.ne.s32.totalorder %s66, %s69
    %p78 = scmp.eq.s32.totalorder %s15, 1
    %p79 = por %p77, %p78
    %p80 = scmp.ne.s32.totalorder %s69, %s70
    %p81 = scmp.eq.s32.totalorder %s15, 0
    %p82 = por %p80, %p81
    %p83 = scmp.ne.s32.totalorder %s69, %s70
    %p84 = scmp.eq.s32.totalorder %s16, 1
    %p85 = por %p83, %p84
    %p87 = scmp.ne.s32.totalorder %s70, %s86
    %p88 = scmp.eq.s32.totalorder %s16, 0
    %p89 = por %p87, %p88
    %s90 = ssub.s32 %s18, %s25
    %p91 = scmp.eq.s32.totalorder %s90, 0
    %s93 = sadd.s32 %s92, 1
    %s94 = scalar_select %p91, %s92, %s93
    %p97 = pneg %p91
    %p98 = scmp.eq.s32.totalorder %s10, 1
    %p99 = por %p97, %p98
    %p100 = scmp.ne.s32.totalorder %s92, %s95
    %p101 = scmp.eq.s32.totalorder %s10, 0
    %p102 = por %p100, %p101
    %p103 = scmp.ne.s32.totalorder %s92, %s95
    %p104 = scmp.eq.s32.totalorder %s15, 1
    %p105 = por %p103, %p104
    %p106 = scmp.ne.s32.totalorder %s95, %s96
    %p107 = scmp.eq.s32.totalorder %s15, 0
    %p108 = por %p106, %p107
    %p109 = scmp.ne.s32.totalorder %s95, %s96
    %p110 = scmp.eq.s32.totalorder %s16, 1
    %p111 = por %p109, %p110
    %p113 = scmp.ne.s32.totalorder %s96, %s112
    %p114 = scmp.eq.s32.totalorder %s16, 0
    %p115 = por %p113, %p114
    %s117 = sadd.s32 %s116, 1
    %p120 = scmp.eq.s32.totalorder %s10, 1
    %p121 = scmp.ne.s32.totalorder %s116, %s118
    %p122 = scmp.eq.s32.totalorder %s10, 0
    %p123 = por %p121, %p122
    %p124 = scmp.ne.s32.totalorder %s116, %s118
    %p125 = scmp.eq.s32.totalorder %s15, 1
    %p126 = por %p124, %p125
    %p127 = scmp.ne.s32.totalorder %s118, %s119
    %p128 = scmp.eq.s32.totalorder %s15, 0
    %p129 = por %p127, %p128
    %p130 = scmp.ne.s32.totalorder %s118, %s119
    %p131 = scmp.eq.s32.totalorder %s16, 1
    %p132 = por %p130, %p131
    %p134 = scmp.ne.s32.totalorder %s119, %s133
    %p135 = scmp.eq.s32.totalorder %s16, 0
    %p136 = por %p134, %p135
    %s137 = ssub.s32 %s17, %s29
    %p138 = scmp.eq.s32.totalorder %s137, 0
    %s140 = sadd.s32 %s139, 1
    %s141 = scalar_select %p138, %s139, %s140
    %p144 = pneg %p138
    %p145 = scmp.eq.s32.totalorder %s10, 1
    %p146 = por %p144, %p145
    %p147 = scmp.ne.s32.totalorder %s139, %s142
    %p148 = scmp.eq.s32.totalorder %s10, 0
    %p149 = por %p147, %p148
    %p150 = scmp.ne.s32.totalorder %s139, %s142
    %p151 = scmp.eq.s32.totalorder %s15, 1
    %p152 = por %p150, %p151
    %p153 = scmp.ne.s32.totalorder %s142, %s143
    %p154 = scmp.eq.s32.totalorder %s15, 0
    %p155 = por %p153, %p154
    %p156 = scmp.ne.s32.totalorder %s142, %s143
    %p157 = scmp.eq.s32.totalorder %s16, 1
    %p158 = por %p156, %p157
    %p160 = scmp.ne.s32.totalorder %s143, %s159
    %p161 = scmp.eq.s32.totalorder %s16, 0
    %p162 = por %p160, %p161
    %p163 = scmp.le.s32.totalorder 1, %s10
    %p164 = scmp.lt.s32.totalorder %s10, 3
    %p165 = pnand %p163, %p164
    %p166 = pneg %p165
    // Predicated region
    $region9: #{tpu_custom_call.1} parent=5 // pred_check
      _
    $region10: #{tpu_custom_call.1} parent=5 // pred_check_branch
      %168 = sbr.rel (%p165) target = $region12
    $region11: #{tpu_custom_call.1} parent=5 // pred_region
      %s169 = ssub.s32 %s10, 1
      // Predicated region
      $region13: #{tpu_custom_call.1} parent=11 // pred_check
        %p170 = pneg %p108
      $region14: #{tpu_custom_call.1} parent=11 // pred_check_branch
        %172 = sbr.rel (%p170) target = $region16
      $region15: #{tpu_custom_call.1} parent=11 // pred_region
        %s173 = smul.u32 3, %s20
        %p174 = scmp.lt.s32.totalorder %s173, 2
        %s175 = scalar_select %p174, %s173, 2
        %s176 = scalar_lea.vmem %s2, %s175
        %s177 = smul.u32 3, %s20
      $region16: #{tpu_custom_call.1} parent=11 // pred_fallthru
        _
      // Predicated region
      $region17: #{tpu_custom_call.1} parent=11 // pred_check
        %p178 = pneg %p129
      $region18: #{tpu_custom_call.1} parent=11 // pred_check_branch
        %180 = sbr.rel (%p178) target = $region20
      $region19: #{tpu_custom_call.1} parent=11 // pred_region
        _
      $region20: #{tpu_custom_call.1} parent=11 // pred_fallthru
        _
    $region12: #{tpu_custom_call.1} parent=5 // pred_fallthru
      _
    %p181 = scmp.lt.s32.totalorder %s10, 2
    // Predicated region
    $region21: #{tpu_custom_call.1} parent=5 // pred_check
      %p182 = pneg %p181
    $region22: #{tpu_custom_call.1} parent=5 // pred_check_branch
      %184 = sbr.rel (%p182) target = $region24
    $region23: #{tpu_custom_call.1} parent=5 // pred_region
      // Predicated region
      $region25: #{tpu_custom_call.1} parent=23 // pred_check
        %p185 = pneg %p44
      $region26: #{tpu_custom_call.1} parent=23 // pred_check_branch
        %187 = sbr.rel (%p185) target = $region28
      $region27: #{tpu_custom_call.1} parent=23 // pred_region
        %s188 = smul.u32 3, %s18
        %s189 = ssub.s32 4, %s188
        %p190 = scmp.lt.s32.totalorder %s189, 3
        %s191 = scalar_select %p190, %s189, 3
        %s192 = smul.u32 32, %s191
        %p193 = scmp.lt.s32.totalorder %s17, 1
        %s194 = scalar_select %p193, %s17, 1
        %p195 = scmp.lt.s32.totalorder %s188, 3
        %s196 = scalar_select %p195, %s188, 3
        %s197 = smul.addr %s194, 4
        %s198 = sadd.s32 %s196, %s197
        %s199 = smul.addr %s198, 2
        %s200 = scalar_lea.vmem %s0, %s199
        %s201 = smul.u32 3, %s18
        %s202 = ssub.s32 4, %s201
        %p203 = scmp.lt.s32.totalorder %s202, 3
        %s204 = scalar_select %p203, %s202, 3
        %s205 = smul.u32 32, %s204
      $region28: #{tpu_custom_call.1} parent=23 // pred_fallthru
        _
      // Predicated region
      $region29: #{tpu_custom_call.1} parent=23 // pred_check
        %p206 = pneg %p76
      $region30: #{tpu_custom_call.1} parent=23 // pred_check_branch
        %208 = sbr.rel (%p206) target = $region32
      $region31: #{tpu_custom_call.1} parent=23 // pred_region
        %s209 = sadd.s32 %s18, 1
        %s210 = smul.u32 %s209, 3
        %p211 = scmp.lt.s32.totalorder %s17, 1
        %s212 = scalar_select %p211, %s17, 1
        %p213 = scmp.lt.s32.totalorder %s210, 3
        %s214 = scalar_select %p213, %s210, 3
        %s215 = smul.addr %s212, 4
        %s216 = sadd.s32 %s214, %s215
        %s217 = smul.addr %s216, 2
        %s218 = scalar_lea.vmem %s1, %s217
        %s219 = sadd.s32 %s18, 1
        %s220 = smul.u32 %s219, 3
      $region32: #{tpu_custom_call.1} parent=23 // pred_fallthru
        _
    $region24: #{tpu_custom_call.1} parent=5 // pred_fallthru
      _
    %p221 = scmp.le.s32.totalorder 1, %s10
    %p222 = scmp.lt.s32.totalorder %s10, 3
    %p223 = pnand %p221, %p222
    %p224 = pneg %p223
    // Predicated region
    $region33: #{tpu_custom_call.1} parent=5 // pred_check
      _
    $region34: #{tpu_custom_call.1} parent=5 // pred_check_branch
      %226 = sbr.rel (%p223) target = $region36
    $region35: #{tpu_custom_call.1} parent=5 // pred_region
      %s227 = ssub.s32 %s10, 1
      %s228 = smul.u32 3, %s20
      %s229 = ssub.s32 4, %s228
      %p230 = scmp.lt.s32.totalorder %s229, 3
      %s231 = scalar_select %p230, %s229, 3
      %s232 = smul.u32 32, %s231
      %p233 = scmp.lt.s32.totalorder %s19, 1
      %s234 = scalar_select %p233, %s19, 1
      %p235 = scmp.lt.s32.totalorder %s228, 3
      %s236 = scalar_select %p235, %s228, 3
      %s237 = smul.addr %s234, 4
      %s238 = sadd.s32 %s236, %s237
      %s239 = smul.addr %s238, 2
      %s240 = scalar_lea.vmem %s0, %s239
      %p241 = pneg %p50
      %p242 = pneg %p47
      %s243 = sadd.s32 %s20, 1
      %s244 = smul.u32 %s243, 3
      %p245 = scmp.lt.s32.totalorder %s19, 1
      %s246 = scalar_select %p245, %s19, 1
      %p247 = scmp.lt.s32.totalorder %s244, 3
      %s248 = scalar_select %p247, %s244, 3
      %s249 = smul.addr %s246, 4
      %s250 = sadd.s32 %s248, %s249
      %s251 = smul.addr %s250, 2
      %s252 = scalar_lea.vmem %s1, %s251
      %p253 = pneg %p82
      %p254 = pneg %p79
      %s255 = smul.u32 3, %s20
      %p256 = scmp.lt.s32.totalorder %s255, 2
      %s257 = scalar_select %p256, %s255, 2
      %s258 = scalar_lea.vmem %s2, %s257
      %p259 = pneg %p108
      %p260 = pneg %p105
      %p261 = pneg %p129
      %p262 = pneg %p126
      %p263 = pneg %p155
      %p264 = pneg %p152
      %p265 = scmp.lt.s32.totalorder %s19, 1
      %s266 = scalar_select %p265, %s19, 1
      %s267 = smul.addr %s266, 8
      %s268 = smul.addr %s267, 8
      %s269 = scalar_lea.vmem %s4, %s268
      %s270 = smul.u32 3, %s20
      %s271 = ssub.s32 4, %s270
      %p272 = scmp.lt.s32.totalorder %s271, 3
      %s273 = scalar_select %p272, %s271, 3
      %s274 = smul.u32 32, %s273
      %p275 = scmp.lt.s32.totalorder %s19, 1
      %s276 = scalar_select %p275, %s19, 1
      %p277 = scmp.lt.s32.totalorder %s270, 3
      %s278 = scalar_select %p277, %s270, 3
      %s279 = smul.addr %s276, 4
      %s280 = sadd.s32 %s278, %s279
      %s281 = smul.addr %s280, 2
      %s282 = scalar_lea.vmem %s0, %s281
      %s283 = smul.u32 3, %s20
      %s284 = ssub.s32 4, %s283
      %p285 = scmp.lt.s32.totalorder %s284, 3
      %s286 = scalar_select %p285, %s284, 3
      %s287 = smul.u32 32, %s286
      %s288 = sadd.s32 %s20, 1
      %s289 = smul.u32 %s288, 3
      %p290 = scmp.lt.s32.totalorder %s19, 1
      %s291 = scalar_select %p290, %s19, 1
      %p292 = scmp.lt.s32.totalorder %s289, 3
      %s293 = scalar_select %p292, %s289, 3
      %s294 = smul.addr %s291, 4
      %s295 = sadd.s32 %s293, %s294
      %s296 = smul.addr %s295, 2
      %s297 = scalar_lea.vmem %s1, %s296
      %s298 = sadd.s32 %s20, 1
      %s299 = smul.u32 %s298, 3
      %s300 = smul.u32 3, %s20
      %p301 = scmp.lt.s32.totalorder %s300, 2
      %s302 = scalar_select %p301, %s300, 2
      %s303 = scalar_lea.vmem %s2, %s302
      %s304 = smul.u32 3, %s20
      %p305 = scmp.lt.s32.totalorder %s19, 1
      %s306 = scalar_select %p305, %s19, 1
      %s307 = smul.addr %s306, 8
      %s308 = smul.addr %s307, 8
      %s309 = scalar_lea.vmem %s4, %s308
      %p311 = scmp.eq.s32.totalorder %s20, 0
      // Predicated region
      $region37: #{tpu_custom_call.1} parent=35 // pred_check
        %p312 = pneg %p311
      $region38: #{tpu_custom_call.1} parent=35 // pred_check_branch
        %314 = sbr.rel (%p312) target = $region40
      $region39: #{tpu_custom_call.1} parent=35 // pred_region
        %vm315 = vcmask 7168
        %316 = vst.msk [vmem:[#allocation3] sm:$0xff] %vm315, 0.0
        %317 = vst.msk [vmem:[#allocation3 + $0x8] sm:$0xff] %vm315, 0.0
        %318 = vst.msk [vmem:[#allocation3 + $0x10] sm:$0xff] %vm315, 0.0
        %319 = vst.msk [vmem:[#allocation3 + $0x18] sm:$0xff] %vm315, 0.0
        %320 = vst.msk [vmem:[#allocation3 + $0x20] sm:$0xff] %vm315, 0.0
        %321 = vst.msk [vmem:[#allocation3 + $0x28] sm:$0xff] %vm315, 0.0
        %322 = vst.msk [vmem:[#allocation3 + $0x30] sm:$0xff] %vm315, 0.0
        %323 = vst.msk [vmem:[#allocation3 + $0x38] sm:$0xff] %vm315, 0.0
      $region40: #{tpu_custom_call.1} parent=35 // pred_fallthru
        _
      %v324 = vld [vmem:[%s303] sm:$0x7]
      %v325 = vld [vmem:[%s282] sm:$0x3f]
      %v326 = vld [vmem:[%s297] sm:$0x3]
      %v328 = vcombine.high %v325, %v325
      %v330 = vunpack.c.l.s4 1983009808
      %v331 = vunpack.c.0.s8 %v330
      %v332 = vlaneseq
      %v333 = vshrl.u32 %v332, 7
      %v334 = vsub.s32 %v331, %v333
      %v335 = vrot.slane %v325, %v334
      %v337 = vunpack.c.l.s4 1983009808
      %v338 = vunpack.c.0.s8 %v337
      %v339 = vlaneseq
      %v340 = vshrl.u32 %v339, 7
      %v341 = vsub.s32 %v338, %v340
      %v342 = vrot.slane %v328, %v341
      %v343 = vcombine.high %v335, %v335
      %v349 = vunpack.c.l.s4 1966171168
      %v350 = vunpack.c.0.s8 %v349
      %v351 = vlaneseq
      %v352 = vshrl.u32 %v351, 7
      %v353 = vsub.s32 %v350, %v352
      %v354 = vrot.slane %v324, %v353
      %v355 = vcombine.high %v354, %v354
      %v357 = vunpack.c.l.s4 1966171168
      %v358 = vunpack.c.0.s8 %v357
      %v359 = vlaneseq
      %v360 = vshrl.u32 %v359, 7
      %v361 = vsub.s32 %v358, %v360
      %v362 = vrot.slane %v354, %v361
      %v364 = vunpack.c.l.s4 1966171168
      %v365 = vunpack.c.0.s8 %v364
      %v366 = vlaneseq
      %v367 = vshrl.u32 %v366, 7
      %v368 = vsub.s32 %v365, %v367
      %v369 = vrot.slane %v355, %v368
      %v370 = vcombine.high %v362, %v362
      %v372 = vpack.i.b16 %v362, %v362
      %v374 = vlaneseq
      %v375 = vshrl.u32 %v374, 7
      %v376 = vsub.s32 0, %v375
      %v377 = vrot.slane %v372, %v376
      %v379 = vpack.i.b16 %v369, %v369
      %v381 = vlaneseq
      %v382 = vshrl.u32 %v381, 7
      %v383 = vsub.s32 0, %v382
      %v384 = vrot.slane %v379, %v383
      %v386 = vpack.i.b16 %v370, %v370
      %v388 = vlaneseq
      %v389 = vshrl.u32 %v388, 7
      %v390 = vsub.s32 0, %v389
      %v391 = vrot.slane %v386, %v390
      %v392 = vmul.bf16 %v335, %v377
      %v393 = vmul.bf16 %v343, %v384
      %v394 = vmul.bf16 %v342, %v391
      %v398 = vunpack.c.l.b16 %v392
      %v399 = vunpack.c.l.b16 %v393
      %v400 = vunpack.c.l.b16 %v394
      %v401 = vpack.c.b16 %v399, %v398
      %v402 = vpack.c.b16 %v400, %v400
      %405 = vst [vmem:[#allocation2] sm:$0x33] %v401
      %406 = vst [vmem:[#allocation2 + $0x8] sm:$0x3] %v402
      %410 = vrot.lane.b32.xlu0 %v377, 1
      %v411 = vpop.permute.xlu0 %410
      %412 = vrot.lane.b32.xlu0 %v384, 1
      %v413 = vpop.permute.xlu0 %412
      %414 = vrot.lane.b32.xlu0 %v391, 1
      %v415 = vpop.permute.xlu0 %414
      %vm416 = vcmask 7168
      %v417 = vsel %vm416, %v411, %v413
      %v418 = vsel %vm416, %v413, %v415
      %v423 = vmul.bf16 %v335, %v411
      %v424 = vmul.bf16 %v343, %v417
      %v425 = vmul.bf16 %v342, %v418
      %v426 = vmul.bf16 %v326, %v415
      %v431 = vunpack.c.l.b16 %v423
      %v432 = vunpack.c.l.b16 %v424
      %v433 = vunpack.c.l.b16 %v425
      %v434 = vunpack.c.l.b16 %v426
      %v435 = vpack.c.b16 %v432, %v431
      %v436 = vpack.c.b16 %v434, %v433
      %v437 = vrot.slane %v435, 6
      %v438 = vrot.slane %v436, 6
      %439 = vrot.lane.b32.xlu0 %v437, 127
      %v440 = vpop.permute.xlu0 %439
      %441 = vrot.lane.b32.xlu0 %v438, 127
      %v442 = vpop.permute.xlu0 %441
      %v443 = vrot.slane %v440, 4
      %v444 = vrot.slane %v442, 4
      %vm445 = vcmask 1043456
      %v446 = vsel %vm445, %v443, %v444
      %vm447 = vcmask 1039360
      %v448 = vsel %vm447, %v440, %v446
      %v449 = vsel %vm447, %v442, %v444
      %452 = vst [vmem:[#allocation2] sm:$0xcc] %v448
      %453 = vst [vmem:[#allocation2 + $0x8] sm:$0xc] %v449
      %454 = vrot.lane.b32.xlu0 %v377, 2
      %v455 = vpop.permute.xlu0 %454
      %456 = vrot.lane.b32.xlu0 %v384, 2
      %v457 = vpop.permute.xlu0 %456
      %458 = vrot.lane.b32.xlu0 %v391, 2
      %v459 = vpop.permute.xlu0 %458
      %vm460 = vcmask 15360
      %v461 = vsel %vm460, %v455, %v457
      %v462 = vsel %vm460, %v457, %v459
      %v467 = vmul.bf16 %v335, %v455
      %v468 = vmul.bf16 %v343, %v461
      %v469 = vmul.bf16 %v342, %v462
      %v470 = vmul.bf16 %v326, %v459
      %v475 = vunpack.c.l.b16 %v467
      %v476 = vunpack.c.l.b16 %v468
      %v477 = vunpack.c.l.b16 %v469
      %v478 = vunpack.c.l.b16 %v470
      %v479 = vpack.c.b16 %v476, %v475
      %v480 = vpack.c.b16 %v478, %v477
      %481 = vrot.lane.b32.xlu0 %v479, 126
      %v482 = vpop.permute.xlu0 %481
      %483 = vrot.lane.b32.xlu0 %v480, 126
      %v484 = vpop.permute.xlu0 %483
      %v485 = vrot.slane %v482, 4
      %v486 = vrot.slane %v484, 4
      %v487 = vsel %vm445, %v485, %v486
      %vm488 = vcmask 1031168
      %v489 = vsel %vm488, %v482, %v487
      %v490 = vsel %vm488, %v484, %v486
      %493 = vst [vmem:[#allocation2 + $0xc] sm:$0x33] %v489
      %494 = vst [vmem:[#allocation2 + $0x14] sm:$0x3] %v490
      %495 = vrot.lane.b32.xlu0 %v377, 18
      %v496 = vpop.permute.xlu0 %495
      %497 = vrot.lane.b32.xlu0 %v384, 18
      %v498 = vpop.permute.xlu0 %497
      %499 = vrot.lane.b32.xlu0 %v391, 18
      %v500 = vpop.permute.xlu0 %499
      %vm501 = vcmask 146432
      %v502 = vsel %vm501, %v496, %v498
      %v503 = vsel %vm501, %v498, %v500
      %v508 = vmul.bf16 %v335, %v496
      %v509 = vmul.bf16 %v343, %v502
      %v510 = vmul.bf16 %v342, %v503
      %v511 = vmul.bf16 %v326, %v500
      %v516 = vunpack.c.l.b16 %v508
      %v517 = vunpack.c.l.b16 %v509
      %v518 = vunpack.c.l.b16 %v510
      %v519 = vunpack.c.l.b16 %v511
      %v520 = vpack.c.b16 %v517, %v516
      %v521 = vpack.c.b16 %v519, %v518
      %v522 = vrot.slane %v520, 6
      %v523 = vrot.slane %v521, 6
      %524 = vrot.lane.b32.xlu0 %v522, 110
      %v525 = vpop.permute.xlu0 %524
      %526 = vrot.lane.b32.xlu0 %v523, 110
      %v527 = vpop.permute.xlu0 %526
      %v528 = vrot.slane %v525, 4
      %v529 = vrot.slane %v527, 4
      %v530 = vsel %vm445, %v528, %v529
      %vm531 = vcmask 900096
      %v532 = vsel %vm531, %v525, %v530
      %v533 = vsel %vm531, %v527, %v529
      %536 = vst [vmem:[#allocation2 + $0xc] sm:$0xcc] %v532
      %537 = vst [vmem:[#allocation2 + $0x14] sm:$0xc] %v533
      %538 = vrot.lane.b32.xlu0 %v377, 19
      %v539 = vpop.permute.xlu0 %538
      %540 = vrot.lane.b32.xlu0 %v384, 19
      %v541 = vpop.permute.xlu0 %540
      %542 = vrot.lane.b32.xlu0 %v391, 19
      %v543 = vpop.permute.xlu0 %542
      %vm544 = vcmask 154624
      %v545 = vsel %vm544, %v539, %v541
      %v546 = vsel %vm544, %v541, %v543
      %v551 = vmul.bf16 %v335, %v539
      %v552 = vmul.bf16 %v343, %v545
      %v553 = vmul.bf16 %v342, %v546
      %v554 = vmul.bf16 %v326, %v543
      %v559 = vunpack.c.l.b16 %v551
      %v560 = vunpack.c.l.b16 %v552
      %v561 = vunpack.c.l.b16 %v553
      %v562 = vunpack.c.l.b16 %v554
      %v563 = vpack.c.b16 %v560, %v559
      %v564 = vpack.c.b16 %v562, %v561
      %565 = vrot.lane.b32.xlu0 %v563, 109
      %v566 = vpop.permute.xlu0 %565
      %567 = vrot.lane.b32.xlu0 %v564, 109
      %v568 = vpop.permute.xlu0 %567
      %v569 = vrot.slane %v566, 4
      %v570 = vrot.slane %v568, 4
      %v571 = vsel %vm445, %v569, %v570
      %vm572 = vcmask 891904
      %v573 = vsel %vm572, %v566, %v571
      %v574 = vsel %vm572, %v568, %v570
      %577 = vst [vmem:[#allocation2 + $0x18] sm:$0x33] %v573
      %578 = vst [vmem:[#allocation2 + $0x20] sm:$0x3] %v574
      %579 = vrot.lane.b32.xlu0 %v377, 20
      %v580 = vpop.permute.xlu0 %579
      %581 = vrot.lane.b32.xlu0 %v384, 20
      %v582 = vpop.permute.xlu0 %581
      %583 = vrot.lane.b32.xlu0 %v391, 20
      %v584 = vpop.permute.xlu0 %583
      %vm585 = vcmask 162816
      %v586 = vsel %vm585, %v580, %v582
      %v587 = vsel %vm585, %v582, %v584
      %v592 = vmul.bf16 %v335, %v580
      %v593 = vmul.bf16 %v343, %v586
      %v594 = vmul.bf16 %v342, %v587
      %v595 = vmul.bf16 %v326, %v584
      %v600 = vunpack.c.l.b16 %v592
      %v601 = vunpack.c.l.b16 %v593
      %v602 = vunpack.c.l.b16 %v594
      %v603 = vunpack.c.l.b16 %v595
      %v604 = vpack.c.b16 %v601, %v600
      %v605 = vpack.c.b16 %v603, %v602
      %v606 = vrot.slane %v604, 6
      %v607 = vrot.slane %v605, 6
      %608 = vrot.lane.b32.xlu0 %v606, 108
      %v609 = vpop.permute.xlu0 %608
      %610 = vrot.lane.b32.xlu0 %v607, 108
      %v611 = vpop.permute.xlu0 %610
      %v612 = vrot.slane %v609, 4
      %v613 = vrot.slane %v611, 4
      %v614 = vsel %vm445, %v612, %v613
      %vm615 = vcmask 883712
      %v616 = vsel %vm615, %v609, %v614
      %v617 = vsel %vm615, %v611, %v613
      %620 = vst [vmem:[#allocation2 + $0x18] sm:$0xcc] %v616
      %621 = vst [vmem:[#allocation2 + $0x20] sm:$0xc] %v617
      %622 = vrot.lane.b32.xlu0 %v377, 36
      %v623 = vpop.permute.xlu0 %622
      %624 = vrot.lane.b32.xlu0 %v384, 36
      %v625 = vpop.permute.xlu0 %624
      %626 = vrot.lane.b32.xlu0 %v391, 36
      %v627 = vpop.permute.xlu0 %626
      %vm628 = vcmask 293888
      %v629 = vsel %vm628, %v623, %v625
      %v630 = vsel %vm628, %v625, %v627
      %v635 = vmul.bf16 %v335, %v623
      %v636 = vmul.bf16 %v343, %v629
      %v637 = vmul.bf16 %v342, %v630
      %v638 = vmul.bf16 %v326, %v627
      %v643 = vunpack.c.l.b16 %v635
      %v644 = vunpack.c.l.b16 %v636
      %v645 = vunpack.c.l.b16 %v637
      %v646 = vunpack.c.l.b16 %v638
      %v647 = vpack.c.b16 %v644, %v643
      %v648 = vpack.c.b16 %v646, %v645
      %649 = vrot.lane.b32.xlu0 %v647, 92
      %v650 = vpop.permute.xlu0 %649
      %651 = vrot.lane.b32.xlu0 %v648, 92
      %v652 = vpop.permute.xlu0 %651
      %v653 = vrot.slane %v650, 4
      %v654 = vrot.slane %v652, 4
      %v655 = vsel %vm445, %v653, %v654
      %vm656 = vcmask 752640
      %v657 = vsel %vm656, %v650, %v655
      %v658 = vsel %vm656, %v652, %v654
      %661 = vst [vmem:[#allocation2 + $0x24] sm:$0x33] %v657
      %662 = vst [vmem:[#allocation2 + $0x2c] sm:$0x3] %v658
      %663 = vrot.lane.b32.xlu0 %v377, 37
      %v664 = vpop.permute.xlu0 %663
      %665 = vrot.lane.b32.xlu0 %v384, 37
      %v666 = vpop.permute.xlu0 %665
      %667 = vrot.lane.b32.xlu0 %v391, 37
      %v668 = vpop.permute.xlu0 %667
      %vm669 = vcmask 302080
      %v670 = vsel %vm669, %v664, %v666
      %v671 = vsel %vm669, %v666, %v668
      %v676 = vmul.bf16 %v335, %v664
      %v677 = vmul.bf16 %v343, %v670
      %v678 = vmul.bf16 %v342, %v671
      %v679 = vmul.bf16 %v326, %v668
      %v684 = vunpack.c.l.b16 %v676
      %v685 = vunpack.c.l.b16 %v677
      %v686 = vunpack.c.l.b16 %v678
      %v687 = vunpack.c.l.b16 %v679
      %v688 = vpack.c.b16 %v685, %v684
      %v689 = vpack.c.b16 %v687, %v686
      %v690 = vrot.slane %v688, 6
      %v691 = vrot.slane %v689, 6
      %692 = vrot.lane.b32.xlu0 %v690, 91
      %v693 = vpop.permute.xlu0 %692
      %694 = vrot.lane.b32.xlu0 %v691, 91
      %v695 = vpop.permute.xlu0 %694
      %v696 = vrot.slane %v693, 4
      %v697 = vrot.slane %v695, 4
      %v698 = vsel %vm445, %v696, %v697
      %vm699 = vcmask 744448
      %v700 = vsel %vm699, %v693, %v698
      %v701 = vsel %vm699, %v695, %v697
      %704 = vst [vmem:[#allocation2 + $0x24] sm:$0xcc] %v700
      %705 = vst [vmem:[#allocation2 + $0x2c] sm:$0xc] %v701
      %706 = vrot.lane.b32.xlu0 %v377, 38
      %v707 = vpop.permute.xlu0 %706
      %708 = vrot.lane.b32.xlu0 %v384, 38
      %v709 = vpop.permute.xlu0 %708
      %710 = vrot.lane.b32.xlu0 %v391, 38
      %v711 = vpop.permute.xlu0 %710
      %vm712 = vcmask 310272
      %v713 = vsel %vm712, %v707, %v709
      %v714 = vsel %vm712, %v709, %v711
      %v719 = vmul.bf16 %v335, %v707
      %v720 = vmul.bf16 %v343, %v713
      %v721 = vmul.bf16 %v342, %v714
      %v722 = vmul.bf16 %v326, %v711
      %v727 = vunpack.c.l.b16 %v719
      %v728 = vunpack.c.l.b16 %v720
      %v729 = vunpack.c.l.b16 %v721
      %v730 = vunpack.c.l.b16 %v722
      %v731 = vpack.c.b16 %v728, %v727
      %v732 = vpack.c.b16 %v730, %v729
      %733 = vrot.lane.b32.xlu0 %v731, 90
      %v734 = vpop.permute.xlu0 %733
      %735 = vrot.lane.b32.xlu0 %v732, 90
      %v736 = vpop.permute.xlu0 %735
      %v737 = vrot.slane %v734, 4
      %v738 = vrot.slane %v736, 4
      %v739 = vsel %vm445, %v737, %v738
      %vm740 = vcmask 736256
      %v741 = vsel %vm740, %v734, %v739
      %v742 = vsel %vm740, %v736, %v738
      %745 = vst [vmem:[#allocation2 + $0x30] sm:$0x33] %v741
      %746 = vst [vmem:[#allocation2 + $0x38] sm:$0x3] %v742
      %v747 = vcombine.low %v324, %v324
      %v749 = vunpack.c.l.s4 1935823168
      %v750 = vunpack.c.0.s8 %v749
      %v751 = vlaneseq
      %v752 = vshrl.u32 %v751, 7
      %v753 = vsub.s32 %v750, %v752
      %v754 = vrot.slane %v747, %v753
      %v755 = vcombine.high %v754, %v754
      %v757 = vunpack.c.l.s4 1935823168
      %v758 = vunpack.c.0.s8 %v757
      %v759 = vlaneseq
      %v760 = vshrl.u32 %v759, 7
      %v761 = vsub.s32 %v758, %v760
      %v762 = vrot.slane %v754, %v761
      %v764 = vunpack.c.l.s4 1935823168
      %v765 = vunpack.c.0.s8 %v764
      %v766 = vlaneseq
      %v767 = vshrl.u32 %v766, 7
      %v768 = vsub.s32 %v765, %v767
      %v769 = vrot.slane %v755, %v768
      %772 = vst [vmem:[#allocation2 + $0x30] sm:$0x44] %v762
      %773 = vst [vmem:[#allocation2 + $0x38] sm:$0x4] %v769
      %v774 = vld [vmem:[%s3] sm:$0xf]
      %v775 = vld [vmem:[%s3 + $0x4] sm:$0xf]
      %v776 = vld [vmem:[%s3 + $0x8] sm:$0xf]
      %v777 = vld [vmem:[%s3 + $0xc] sm:$0xf]
      %v778 = vld [vmem:[%s3 + $0x10] sm:$0xf]
      %v779 = vld [vmem:[%s3 + $0x14] sm:$0xf]
      %v780 = vld [vmem:[%s3 + $0x18] sm:$0xf]
      %v781 = vld [vmem:[%s3 + $0x1c] sm:$0xf]
      %v782 = vld [vmem:[#allocation2] sm:$0xff]
      %v783 = vld [vmem:[#allocation2 + $0x8] sm:$0xf]
      %v784 = vld [vmem:[#allocation2 + $0xc] sm:$0xff]
      %v785 = vld [vmem:[#allocation2 + $0x14] sm:$0xf]
      %v786 = vld [vmem:[#allocation2 + $0x18] sm:$0xff]
      %v787 = vld [vmem:[#allocation2 + $0x20] sm:$0xf]
      %v788 = vld [vmem:[#allocation2 + $0x24] sm:$0xff]
      %v789 = vld [vmem:[#allocation2 + $0x2c] sm:$0xf]
      %v790 = vld [vmem:[#allocation2 + $0x30] sm:$0x77]
      %v791 = vld [vmem:[#allocation2 + $0x38] sm:$0x7]
      %v800 = vunpack.c.l.b16 %v774
      %v801 = vunpack.c.l.b16 %v775
      %v802 = vunpack.c.l.b16 %v776
      %v803 = vunpack.c.l.b16 %v777
      %v804 = vunpack.c.l.b16 %v778
      %v805 = vunpack.c.l.b16 %v779
      %v806 = vunpack.c.l.b16 %v780
      %v807 = vunpack.c.l.b16 %v781
      %v808 = vpack.c.b16 %v801, %v800
      %v809 = vpack.c.b16 %v803, %v802
      %v810 = vpack.c.b16 %v805, %v804
      %v811 = vpack.c.b16 %v807, %v806
      %v822 = vunpack.c.l.b16 %v782
      %v823 = vunpack.c.h.b16 %v782
      %v824 = vunpack.c.l.b16 %v783
      %v825 = vunpack.c.l.b16 %v784
      %v826 = vunpack.c.h.b16 %v784
      %v827 = vunpack.c.l.b16 %v785
      %v828 = vunpack.c.l.b16 %v786
      %v829 = vunpack.c.h.b16 %v786
      %v830 = vunpack.c.l.b16 %v787
      %v831 = vunpack.c.l.b16 %v788
      %v832 = vunpack.c.h.b16 %v788
      %v833 = vunpack.c.l.b16 %v789
      %v834 = vunpack.c.l.b16 %v790
      %v835 = vunpack.c.h.b16 %v790
      %v836 = vunpack.c.l.b16 %v791
      %v837 = vpack.c.b16 %v825, %v822
      %v838 = vpack.c.b16 %v826, %v823
      %v839 = vpack.c.b16 %v827, %v824
      %v840 = vpack.c.b16 %v831, %v828
      %v841 = vpack.c.b16 %v832, %v829
      %v842 = vpack.c.b16 %v833, %v830
      %v843 = vpack.c.b16 %v834, %v834
      %v844 = vpack.c.b16 %v835, %v835
      %v845 = vpack.c.b16 %v836, %v836
      %vm852 = vcmask 310272
      %v854 = vsel %vm852, %v808, 0
      %v857 = vsel %vm852, %v809, 0
      %v860 = vsel %vm852, %v810, 0
      %v863 = vsel %vm852, %v811, 0
      %vm865 = vcmask 1042432
      %v867 = vsel %vm865, %v843, 0
      %v870 = vsel %vm865, %v844, 0
      %v873 = vsel %vm865, %v845, 0
      %875 = vmatprep.subr.bf16.mxu0 %v838
      %876 = vmatpush1.bf16.msra.mxu0 %v837
      %877 = vmatprep.subr.bf16.mxu0 %v841
      %878 = vmatpush1.bf16.msra.mxu0 %v840
      %879 = vmatprep.subr.bf16.mxu0 %v870
      %880 = vmatpush1.bf16.msra.mxu0 %v867
      %881 = vmatprep.subr.bf16.mxu0 0
      %882 = vmatpush1.bf16.msra.mxu0 0
      %883 = vmatprep.subr.bf16.mxu0 0
      %884 = vmatpush1.bf16.msra.mxu0 0
      %885 = vmatprep.subr.bf16.mxu0 0
      %886 = vmatpush1.bf16.msra.mxu0 0
      %887 = vmatprep.subr.bf16.mxu0 0
      %888 = vmatpush1.bf16.msra.mxu0 0
      %889 = vmatprep.subr.bf16.mxu0 0
      %890 = vmatpush1.bf16.msra.mxu0 0
      %891 = vmatprep.subr.bf16.mxu0 0
      %892 = vmatpush1.bf16.msra.mxu0 0
      %893 = vmatprep.subr.bf16.mxu0 0
      %894 = vmatpush1.bf16.msra.mxu0 0
      %895 = vmatprep.subr.bf16.mxu0 0
      %896 = vmatpush1.bf16.msra.mxu0 0
      %897 = vmatprep.subr.bf16.mxu0 0
      %898 = vmatpush1.bf16.msra.mxu0 0
      %899 = vmatprep.subr.bf16.mxu0 0
      %900 = vmatpush1.bf16.msra.mxu0 0
      %901 = vmatprep.subr.bf16.mxu0 0
      %902 = vmatpush1.bf16.msra.mxu0 0
      %903 = vmatprep.subr.bf16.mxu0 0
      %904 = vmatpush1.bf16.msra.mxu0 0
      %905 = vmatprep.subr.bf16.mxu0 0
      %906 = vmatpush1.bf16.msra.mxu0 0
      %907 = vmatprep.mubr.bf16.mxu0 0
      %908 = vmatmul.mubr.bf16.gmra.mrb[0].mxu0 %v854
      %v909 = vpop.f32.mrb[0].mxu0
      %v910 = vadd.f32 0.0, %v909
      %v911 = vpop.f32.mrb[0].mxu0
      %v912 = vadd.f32 0.0, %v911
      %v913 = vpop.f32.mrb[0].mxu0
      %v914 = vadd.f32 0.0, %v913
      %v915 = vpop.f32.mrb[0].mxu0
      %v916 = vadd.f32 0.0, %v915
      %917 = vmatprep.mubr.bf16.mxu0 0
      %918 = vmatmul.mubr.bf16.gmra.mrb[0].mxu0 %v857
      %v919 = vpop.f32.mrb[0].mxu0
      %v920 = vadd.f32 0.0, %v919
      %v921 = vpop.f32.mrb[0].mxu0
      %v922 = vadd.f32 0.0, %v921
      %v923 = vpop.f32.mrb[0].mxu0
      %v924 = vadd.f32 0.0, %v923
      %v925 = vpop.f32.mrb[0].mxu0
      %v926 = vadd.f32 0.0, %v925
      %927 = vmatprep.mubr.bf16.mxu0 0
      %928 = vmatmul.mubr.bf16.gmra.mrb[0].mxu0 %v860
      %v929 = vpop.f32.mrb[0].mxu0
      %v930 = vadd.f32 0.0, %v929
      %v931 = vpop.f32.mrb[0].mxu0
      %v932 = vadd.f32 0.0, %v931
      %v933 = vpop.f32.mrb[0].mxu0
      %v934 = vadd.f32 0.0, %v933
      %v935 = vpop.f32.mrb[0].mxu0
      %v936 = vadd.f32 0.0, %v935
      %937 = vmatprep.mubr.bf16.mxu0 0
      %938 = vmatmul.mubr.bf16.gmra.mrb[0].mxu0 %v863
      %v939 = vpop.f32.mrb[0].mxu0
      %v940 = vadd.f32 0.0, %v939
      %v941 = vpop.f32.mrb[0].mxu0
      %v942 = vadd.f32 0.0, %v941
      %v943 = vpop.f32.mrb[0].mxu0
      %v944 = vadd.f32 0.0, %v943
      %v945 = vpop.f32.mrb[0].mxu0
      %v946 = vadd.f32 0.0, %v945
      %947 = vdwg.mxu0
      %948 = vmatprep.subr.bf16.mxu0 0
      %949 = vmatpush1.bf16.msra.mxu0 %v839
      %950 = vmatprep.subr.bf16.mxu0 0
      %951 = vmatpush1.bf16.msra.mxu0 %v842
      %952 = vmatprep.subr.bf16.mxu0 0
      %953 = vmatpush1.bf16.msra.mxu0 %v873
      %954 = vmatprep.subr.bf16.mxu0 0
      %955 = vmatpush1.bf16.msra.mxu0 0
      %956 = vmatprep.subr.bf16.mxu0 0
      %957 = vmatpush1.bf16.msra.mxu0 0
      %958 = vmatprep.subr.bf16.mxu0 0
      %959 = vmatpush1.bf16.msra.mxu0 0
      %960 = vmatprep.subr.bf16.mxu0 0
      %961 = vmatpush1.bf16.msra.mxu0 0
      %962 = vmatprep.subr.bf16.mxu0 0
      %963 = vmatpush1.bf16.msra.mxu0 0
      %964 = vmatprep.subr.bf16.mxu0 0
      %965 = vmatpush1.bf16.msra.mxu0 0
      %966 = vmatprep.subr.bf16.mxu0 0
      %967 = vmatpush1.bf16.msra.mxu0 0
      %968 = vmatprep.subr.bf16.mxu0 0
      %969 = vmatpush1.bf16.msra.mxu0 0
      %970 = vmatprep.subr.bf16.mxu0 0
      %971 = vmatpush1.bf16.msra.mxu0 0
      %972 = vmatprep.subr.bf16.mxu0 0
      %973 = vmatpush1.bf16.msra.mxu0 0
      %974 = vmatprep.subr.bf16.mxu0 0
      %975 = vmatpush1.bf16.msra.mxu0 0
      %976 = vmatprep.subr.bf16.mxu0 0
      %977 = vmatpush1.bf16.msra.mxu0 0
      %978 = vmatprep.subr.bf16.mxu0 0
      %979 = vmatpush1.bf16.msra.mxu0 0
      %980 = vmatprep.mubr.bf16.mxu0 0
      %981 = vmatmul.mubr.bf16.gmra.mrb[0].mxu0 %v854
      %v982 = vpop.f32.mrb[0].mxu0
      %v983 = vadd.f32 0.0, %v982
      %v984 = vpop.f32.mrb[0].mxu0
      %v985 = vpop.f32.mrb[0].mxu0
      %v986 = vadd.f32 0.0, %v985
      %v987 = vpop.f32.mrb[0].mxu0
      %988 = vmatprep.mubr.bf16.mxu0 0
      %989 = vmatmul.mubr.bf16.gmra.mrb[0].mxu0 %v857
      %v990 = vpop.f32.mrb[0].mxu0
      %v991 = vadd.f32 0.0, %v990
      %v992 = vpop.f32.mrb[0].mxu0
      %v993 = vpop.f32.mrb[0].mxu0
      %v994 = vadd.f32 0.0, %v993
      %v995 = vpop.f32.mrb[0].mxu0
      %996 = vmatprep.mubr.bf16.mxu0 0
      %997 = vmatmul.mubr.bf16.gmra.mrb[0].mxu0 %v860
      %v998 = vpop.f32.mrb[0].mxu0
      %v999 = vadd.f32 0.0, %v998
      %v1000 = vpop.f32.mrb[0].mxu0
      %v1001 = vpop.f32.mrb[0].mxu0
      %v1002 = vadd.f32 0.0, %v1001
      %v1003 = vpop.f32.mrb[0].mxu0
      %1004 = vmatprep.mubr.bf16.mxu0 0
      %1005 = vmatmul.mubr.bf16.gmra.mrb[0].mxu0 %v863
      %v1006 = vpop.f32.mrb[0].mxu0
      %v1007 = vadd.f32 0.0, %v1006
      %v1008 = vpop.f32.mrb[0].mxu0
      %v1009 = vpop.f32.mrb[0].mxu0
      %v1010 = vadd.f32 0.0, %v1009
      %v1011 = vpop.f32.mrb[0].mxu0
      %1012 = vdwg.mxu0
      %v1013 = vmax.f32 %v910, 0.0
      %v1014 = vmax.f32 %v912, 0.0
      %v1015 = vmax.f32 %v983, 0.0
      %v1016 = vmax.f32 %v914, 0.0
      %v1017 = vmax.f32 %v916, 0.0
      %v1018 = vmax.f32 %v986, 0.0
      %v1019 = vmax.f32 %v920, 0.0
      %v1020 = vmax.f32 %v922, 0.0
      %v1021 = vmax.f32 %v991, 0.0
      %v1022 = vmax.f32 %v924, 0.0
      %v1023 = vmax.f32 %v926, 0.0
      %v1024 = vmax.f32 %v994, 0.0
      %v1025 = vmax.f32 %v930, 0.0
      %v1026 = vmax.f32 %v932, 0.0
      %v1027 = vmax.f32 %v999, 0.0
      %v1028 = vmax.f32 %v934, 0.0
      %v1029 = vmax.f32 %v936, 0.0
      %v1030 = vmax.f32 %v1002, 0.0
      %v1031 = vmax.f32 %v940, 0.0
      %v1032 = vmax.f32 %v942, 0.0
      %v1033 = vmax.f32 %v1007, 0.0
      %v1034 = vmax.f32 %v944, 0.0
      %v1035 = vmax.f32 %v946, 0.0
      %v1036 = vmax.f32 %v1010, 0.0
      %v1037 = vadd.f32 %v1013, %v1014
      %v1038 = vadd.f32 %v1037, %v1015
      %1039 = vadd.xlane.f32.xlu0 %v1038
      %v1040 = vpop.xlane.xlu0 %1039
      %v1041 = vadd.f32 %v1016, %v1017
      %v1042 = vadd.f32 %v1041, %v1018
      %1043 = vadd.xlane.f32.xlu0 %v1042
      %v1044 = vpop.xlane.xlu0 %1043
      %v1045 = vadd.f32 %v1019, %v1020
      %v1046 = vadd.f32 %v1045, %v1021
      %1047 = vadd.xlane.f32.xlu0 %v1046
      %v1048 = vpop.xlane.xlu0 %1047
      %v1049 = vadd.f32 %v1022, %v1023
      %v1050 = vadd.f32 %v1049, %v1024
      %1051 = vadd.xlane.f32.xlu0 %v1050
      %v1052 = vpop.xlane.xlu0 %1051
      %v1053 = vadd.f32 %v1025, %v1026
      %v1054 = vadd.f32 %v1053, %v1027
      %1055 = vadd.xlane.f32.xlu0 %v1054
      %v1056 = vpop.xlane.xlu0 %1055
      %v1057 = vadd.f32 %v1028, %v1029
      %v1058 = vadd.f32 %v1057, %v1030
      %1059 = vadd.xlane.f32.xlu0 %v1058
      %v1060 = vpop.xlane.xlu0 %1059
      %v1061 = vadd.f32 %v1031, %v1032
      %v1062 = vadd.f32 %v1061, %v1033
      %1063 = vadd.xlane.f32.xlu0 %v1062
      %v1064 = vpop.xlane.xlu0 %1063
      %v1065 = vadd.f32 %v1034, %v1035
      %v1066 = vadd.f32 %v1065, %v1036
      %1067 = vadd.xlane.f32.xlu0 %v1066
      %v1068 = vpop.xlane.xlu0 %1067
      %v1069 = vld [vmem:[#allocation3] sm:$0xff]
      %v1070 = vld [vmem:[#allocation3 + $0x8] sm:$0xff]
      %v1071 = vld [vmem:[#allocation3 + $0x10] sm:$0xff]
      %v1072 = vld [vmem:[#allocation3 + $0x18] sm:$0xff]
      %v1073 = vld [vmem:[#allocation3 + $0x20] sm:$0xff]
      %v1074 = vld [vmem:[#allocation3 + $0x28] sm:$0xff]
      %v1075 = vld [vmem:[#allocation3 + $0x30] sm:$0xff]
      %v1076 = vld [vmem:[#allocation3 + $0x38] sm:$0xff]
      %v1077 = vadd.f32 %v1069, %v1040
      %v1078 = vadd.f32 %v1070, %v1044
      %v1079 = vadd.f32 %v1071, %v1048
      %v1080 = vadd.f32 %v1072, %v1052
      %v1081 = vadd.f32 %v1073, %v1056
      %v1082 = vadd.f32 %v1074, %v1060
      %v1083 = vadd.f32 %v1075, %v1064
      %v1084 = vadd.f32 %v1076, %v1068
      %vm1085 = vcmask 7168
      %1086 = vst.msk [vmem:[#allocation3] sm:$0xff] %vm1085, %v1077
      %1087 = vst.msk [vmem:[#allocation3 + $0x8] sm:$0xff] %vm1085, %v1078
      %1088 = vst.msk [vmem:[#allocation3 + $0x10] sm:$0xff] %vm1085, %v1079
      %1089 = vst.msk [vmem:[#allocation3 + $0x18] sm:$0xff] %vm1085, %v1080
      %1090 = vst.msk [vmem:[#allocation3 + $0x20] sm:$0xff] %vm1085, %v1081
      %1091 = vst.msk [vmem:[#allocation3 + $0x28] sm:$0xff] %vm1085, %v1082
      %1092 = vst.msk [vmem:[#allocation3 + $0x30] sm:$0xff] %vm1085, %v1083
      %1093 = vst.msk [vmem:[#allocation3 + $0x38] sm:$0xff] %vm1085, %v1084
      // Predicated region
      $region41: #{tpu_custom_call.1} parent=35 // pred_check
        %p1094 = pneg %p311
      $region42: #{tpu_custom_call.1} parent=35 // pred_check_branch
        %1096 = sbr.rel (%p1094) target = $region44
      $region43: #{tpu_custom_call.1} parent=35 // pred_region
        %v1097 = vld [vmem:[#allocation3] sm:$0xff]
        %v1098 = vld [vmem:[#allocation3 + $0x8] sm:$0xff]
        %v1099 = vld [vmem:[#allocation3 + $0x10] sm:$0xff]
        %v1100 = vld [vmem:[#allocation3 + $0x18] sm:$0xff]
        %v1101 = vld [vmem:[#allocation3 + $0x20] sm:$0xff]
        %v1102 = vld [vmem:[#allocation3 + $0x28] sm:$0xff]
        %v1103 = vld [vmem:[#allocation3 + $0x30] sm:$0xff]
        %v1104 = vld [vmem:[#allocation3 + $0x38] sm:$0xff]
        %v1105 = vmul.f32 %v1097, 0.00390625
        %v1106 = vmul.f32 %v1098, 0.00390625
        %v1107 = vmul.f32 %v1099, 0.00390625
        %v1108 = vmul.f32 %v1100, 0.00390625
        %v1109 = vmul.f32 %v1101, 0.00390625
        %v1110 = vmul.f32 %v1102, 0.00390625
        %v1111 = vmul.f32 %v1103, 0.00390625
        %v1112 = vmul.f32 %v1104, 0.00390625
        %1113 = vst.msk [vmem:[%s309] sm:$0xff] %vm1085, %v1105
        %1114 = vst.msk [vmem:[%s309 + $0x8] sm:$0xff] %vm1085, %v1106
        %1115 = vst.msk [vmem:[%s309 + $0x10] sm:$0xff] %vm1085, %v1107
        %1116 = vst.msk [vmem:[%s309 + $0x18] sm:$0xff] %vm1085, %v1108
        %1117 = vst.msk [vmem:[%s309 + $0x20] sm:$0xff] %vm1085, %v1109
        %1118 = vst.msk [vmem:[%s309 + $0x28] sm:$0xff] %vm1085, %v1110
        %1119 = vst.msk [vmem:[%s309 + $0x30] sm:$0xff] %vm1085, %v1111
        %1120 = vst.msk [vmem:[%s309 + $0x38] sm:$0xff] %vm1085, %v1112
      $region44: #{tpu_custom_call.1} parent=35 // pred_fallthru
        _
      %p1121 = scmp.lt.s32.totalorder %s19, 1
      %s1122 = scalar_select %p1121, %s19, 1
      %s1123 = smul.addr %s1122, 8
      %s1124 = smul.addr %s1123, 8
      %s1125 = scalar_lea.vmem %s4, %s1124
      // Predicated region
      $region45: #{tpu_custom_call.1} parent=35 // pred_check
        %p1126 = pneg %p152
      $region46: #{tpu_custom_call.1} parent=35 // pred_check_branch
        %1128 = sbr.rel (%p1126) target = $region48
      $region47: #{tpu_custom_call.1} parent=35 // pred_region
        _
      $region48: #{tpu_custom_call.1} parent=35 // pred_fallthru
        _
    $region36: #{tpu_custom_call.1} parent=5 // pred_fallthru
      _
    %p1129 = scmp.le.s32.totalorder 2, %s10
    // Predicated region
    $region49: #{tpu_custom_call.1} parent=5 // pred_check
      %p1130 = pneg %p1129
    $region50: #{tpu_custom_call.1} parent=5 // pred_check_branch
      %1132 = sbr.rel (%p1130) target = $region52
    $region51: #{tpu_custom_call.1} parent=5 // pred_region
      %s1133 = ssub.s32 %s10, 2
      // Predicated region
      $region53: #{tpu_custom_call.1} parent=51 // pred_check
        %p1134 = pneg %p158
      $region54: #{tpu_custom_call.1} parent=51 // pred_check_branch
        %1136 = sbr.rel (%p1134) target = $region56
      $region55: #{tpu_custom_call.1} parent=51 // pred_region
        %p1137 = scmp.lt.s32.totalorder %s21, 1
        %s1138 = scalar_select %p1137, %s21, 1
        %s1139 = smul.addr %s1138, 8
        %s1140 = smul.addr %s1139, 8
        %s1141 = scalar_lea.vmem %s4, %s1140
      $region56: #{tpu_custom_call.1} parent=51 // pred_fallthru
        _
    $region52: #{tpu_custom_call.1} parent=5 // pred_fallthru
      _
  $region6: #{tpu_custom_call.1} parent=0 // loop_footer
    %s14 = sadd.s32 1, %s10
  $region7: #{tpu_custom_call.1} parent=0 // loop_footer_branch
    %9 = sbr.rel target = $region3
  $region8: #{tpu_custom_call.1} parent=0 // loop_exit
    _

</llo_original>
